<compile_context>
chip_gen: v6e
topology: v6e:2x2x1
jax: 0.10.0
libtpu: 0.0.40
codegen_flags: <defaults>
</compile_context>

<pallas_src>
import jax
import jax.numpy as jnp
from jax.experimental import pallas as pl
from jax.experimental.pallas import tpu as pltpu


_MIN_CHUNK_BYTES = 4 * 1024 * 1024   # don't split below ~4 MiB per DMA chunk
_CHUNK_CANDIDATES = (8, 4, 2)        # preferred chunk counts (largest first)


def _make_identity_dma_kernel(rows_per_chunk):
    """Kernel: copy this grid step's row chunk HBM -> HBM with one DMA."""

    def kernel(x_hbm, o_hbm, sem):
        start = pl.program_id(0) * rows_per_chunk
        cp = pltpu.make_async_copy(
            x_hbm.at[pl.ds(start, rows_per_chunk), :],
            o_hbm.at[pl.ds(start, rows_per_chunk), :],
            sem,
        )
        cp.start()
        cp.wait()

    return kernel


def _pick_num_chunks(rows, bytes_per_row):
    """>=2 chunks (feeds both v7x TensorCores) only if each chunk is big enough."""
    for n in _CHUNK_CANDIDATES:
        if rows % n == 0 and (rows // n) * bytes_per_row >= _MIN_CHUNK_BYTES:
            return n
    return 1


def identity_encoder_forward(obs, *, donate=False, num_chunks=None):
    """Identity encoder: returns obs unchanged.

    donate=True short-circuits to `return obs` (zero HBM traffic — nothing
    beats not touching memory for an identity op).  Otherwise a Pallas kernel
    produces a fresh output buffer via a direct HBM->HBM DMA copy (no VMEM
    staging).  `num_chunks` may be forced (must divide the batch dim) to
    exercise the multi-chunk parallel-grid path on small inputs.
    """
    if donate:
        return obs  # zero-op path

    assert obs.ndim == 2, "IdentityEncoder expects flat (batch, feature) obs"
    B, F = obs.shape
    dtype = obs.dtype
    itemsize = jnp.dtype(dtype).itemsize

    if num_chunks is None:
        num_chunks = _pick_num_chunks(B, F * itemsize)
    if num_chunks < 1 or B % num_chunks != 0:
        num_chunks = 1
    rows_per_chunk = B // num_chunks

    return pl.pallas_call(
        _make_identity_dma_kernel(rows_per_chunk),
        out_shape=jax.ShapeDtypeStruct((B, F), dtype),
        grid=(num_chunks,),
        in_specs=[pl.BlockSpec(memory_space=pl.ANY)],
        out_specs=pl.BlockSpec(memory_space=pl.ANY),
        scratch_shapes=[pltpu.SemaphoreType.DMA(())],
        compiler_params=pltpu.CompilerParams(
            dimension_semantics=("parallel",),
        ),
        cost_estimate=pl.CostEstimate(
            flops=0, transcendentals=0, bytes_accessed=2 * B * F * itemsize
        ),
    )(obs)


class IdentityEncoderPallas:
    """JAX/Pallas equivalent of the PyTorch IdentityEncoder."""

    def __init__(self, obs_shape, feature_dim, num_layers, num_filters, *args,
                 use_pallas_copy=False):
        assert len(obs_shape) == 1
        # Matches PyTorch: feature_dim attribute is set to obs_shape[0].
        self.feature_dim = obs_shape[0]
        # Whether __call__ routes through the Pallas HBM->HBM DMA copy
        # (default False: the identity is returned directly, zero cost).
        self.use_pallas_copy = use_pallas_copy

    def __call__(self, obs, detach=False):
        # `detach` only stops grads in PyTorch; the forward value is identical.
        if self.use_pallas_copy:
            return identity_encoder_forward(obs)
        return obs

    def copy_conv_weights_from(self, source):
        pass

    def log(self, L, step, log_freq):
        pass


if __name__ == "__main__":
    key = jax.random.PRNGKey(0)
    k1, k2, k3 = jax.random.split(key, 3)

    # Small obs (F < 128): single full-array HBM->HBM DMA.
    obs = jax.random.normal(k1, (2, 32), dtype=jnp.float32)
    encoder = IdentityEncoderPallas(
        obs_shape=(32,), feature_dim=50, num_layers=2, num_filters=32,
        use_pallas_copy=True,
    )
    out = jax.block_until_ready(encoder(obs))
    assert out.shape == obs.shape
    assert out.dtype == obs.dtype
    assert bool(jnp.array_equal(out, obs))

    # bf16 input, forced 2-chunk parallel grid (the path that feeds both v7x
    # TensorCores on large inputs); chunk boundary lands on a (16,128) tile.
    obs_bf16 = jax.random.normal(k2, (64, 256), dtype=jnp.bfloat16)
    out_bf16 = jax.block_until_ready(
        identity_encoder_forward(obs_bf16, num_chunks=2))
    assert out_bf16.shape == obs_bf16.shape
    assert out_bf16.dtype == obs_bf16.dtype
    assert bool(jnp.array_equal(out_bf16, obs_bf16))

    # f32 input, forced 4-chunk grid; 8-row chunks align to (8,128) tiles.
    obs_f32 = jax.random.normal(k3, (32, 128), dtype=jnp.float32)
    out_f32 = jax.block_until_ready(
        identity_encoder_forward(obs_f32, num_chunks=4))
    assert bool(jnp.array_equal(out_f32, obs_f32))

    # Zero-traffic paths: default class __call__ and donate=True return obs.
    encoder0 = IdentityEncoderPallas(
        obs_shape=(32,), feature_dim=50, num_layers=2, num_filters=32)
    assert encoder0(obs) is obs
    assert identity_encoder_forward(obs, donate=True) is obs

    print("KERNEL_OK")
</pallas_src>

<mosaic_0001>
module attributes {stable_mosaic.version = 11 : i64} {
  func.func @kernel(%arg0: i32, %arg1: memref<2x32xf32, #tpu.memory_space<any>>, %arg2: memref<2x32xf32, #tpu.memory_space<any>>, %arg3: memref<!tpu.dma_semaphore, #tpu.memory_space<semaphore_mem>>) attributes {dimension_semantics = [#tpu.dimension_semantics<parallel>], iteration_bounds = array<i64: 1>, scalar_prefetch = 0 : i64, scratch_operands = 1 : i64, tpu.core_type = #tpu.core_type<tc>, window_params = [{}, {}]} {
    %c2_i32 = arith.constant 2 : i32
    %0 = arith.muli %arg0, %c2_i32 : i32
    %c0_i32 = arith.constant 0 : i32
    %1 = tpu.memref_slice %arg1[%0, %c0_i32] : memref<2x32xf32, #tpu.memory_space<any>> -> memref<2x32xf32, #tpu.memory_space<any>>
    %c0_i32_0 = arith.constant 0 : i32
    %2 = tpu.memref_slice %arg2[%0, %c0_i32_0] : memref<2x32xf32, #tpu.memory_space<any>> -> memref<2x32xf32, #tpu.memory_space<any>>
    tpu.enqueue_dma source(%1 : memref<2x32xf32, #tpu.memory_space<any>>) target(%2 : memref<2x32xf32, #tpu.memory_space<any>>) target_semaphore(%arg3 : memref<!tpu.dma_semaphore, #tpu.memory_space<semaphore_mem>>)
    %c0_i32_1 = arith.constant 0 : i32
    %3 = tpu.memref_slice %arg1[%0, %c0_i32_1] : memref<2x32xf32, #tpu.memory_space<any>> -> memref<2x32xf32, #tpu.memory_space<any>>
    %c0_i32_2 = arith.constant 0 : i32
    %4 = tpu.memref_slice %arg2[%0, %c0_i32_2] : memref<2x32xf32, #tpu.memory_space<any>> -> memref<2x32xf32, #tpu.memory_space<any>>
    tpu.wait_dma2 semaphore(%arg3 : memref<!tpu.dma_semaphore, #tpu.memory_space<semaphore_mem>>) src(%3 : memref<2x32xf32, #tpu.memory_space<any>>) dst(%4 : memref<2x32xf32, #tpu.memory_space<any>>)
    return
  }
}

</mosaic_0001>

<llo_original>
// kernel: tpu_custom_call.1
$region0: #{tpu_custom_call.1}
  #allocation0 [shape = 'u32[]', space=smem, size = 0x4, offset = 0x4, fixed_abs, tag = 'smem constant byte address 0x4 - core index']
  #allocation1 [shape = 'u32[144,128]{1,0:T(1,128)}', space=vmem, size = 0x12000, scoped, tag = 'internal scratch']
  #allocation2 [shape = 's32[1]{0}', space=sflag, size = 0x4, scoped, tag = 'scratch operand']
  #allocation3 [shape = 's32[]', space=sflag, size = 0x4, offset = 0, fixed_abs, tag = 'sflag constant byte address 0x0 - dummy sync flag']
  #allocation4 [shape = 'u32[0]{0}', space=smem, size = 0, offset = 0, fixed_abs, tag = 'smem constant byte address 0x0 - null']
  %s0 = inlined_call_operand.hbm [shape: f32[2,32], index: 0, kind: input, shape index: {}]
  %s1 = inlined_call_operand.hbm [shape: f32[2,32], index: 1, kind: output, shape index: {}]
  %s2 = sld [smem:[#allocation0]]
  $region2: #{tpu_custom_call.1} parent=0
    _
  %s4 = ssub.s32 1, %s2
  %s5 = scalar_select 0, %s4, %s2
  %s6 = smul.u32 0, 2
  %s7 = smul.addr %s6, 16
  %s8 = scalar_lea.hbm %s0, %s7
  %s9 = smul.addr %s6, 16
  %s10 = scalar_lea.hbm %s1, %s9
  %s12 = sshll.u32 1, 14
  %s13 = sxor.u32 4294967295, %s12
  %17 = dma.general %s8, 32, %s10, [#allocation2], 131072, [#allocation4], 0, 0
  %s18 = smul.u32 2, 1
  %s19 = sshll.u32 %s18, 4
  %20 = dma.done [#allocation2], %s19
  %21 = vsyncmov [#allocation2]
  %s22 = vpop.sfrf %21
  %p23 = scmp.eq.s32.totalorder %s22, 0
  %p24 = pneg %p23
  %26 = shalt.err (%p24)

</llo_original>
